<compile_context>
chip_gen: v7x
topology: tpu7x:2x2x1
jax: 0.10.0
libtpu: 0.0.40
codegen_flags: <defaults>
</compile_context>

<pallas_src>
import functools

import jax
import jax.numpy as jnp
from jax.experimental import pallas as pl
from jax.experimental.pallas import tpu as pltpu


_TILE_COLS = 32768  # samples (lanes) per grid step when N is large; multiple of 128


def _refined_rsqrt(x):
    """rsqrt with one Newton step; grouping avoids overflow for tiny x."""
    y = jax.lax.rsqrt(x)
    return y * (1.5 - (0.5 * x * y) * y)


# ------------------------------ kernels ------------------------------

def _weighted_loss_kernel(pred_ref, target_ref, loss_ref, acc_sq_ref, acc_dot_ref,
                          *, n_samples, n_chan, tile_cols, w_rot):
    i = pl.program_id(0)

    @pl.when(i == 0)
    def _():
        acc_sq_ref[...] = jnp.zeros_like(acc_sq_ref)
        acc_dot_ref[...] = jnp.zeros_like(acc_dot_ref)

    # Channel-major block: (n_chan sublanes, tile_cols lanes). Upcast in VMEM.
    p = pred_ref[...].astype(jnp.float32)
    t = target_ref[...].astype(jnp.float32)

    # Sublane masks: channels 0..2 = translation, 3.. = quaternion.
    chan_ids = jax.lax.broadcasted_iota(jnp.int32, (n_chan, 1), 0)
    is_trans = chan_ids < 3
    is_quat = jnp.logical_not(is_trans)
    # Lane mask for the (possibly partial) last tile.
    col_ids = jax.lax.broadcasted_iota(jnp.int32, (1, tile_cols), 1) + i * tile_cols
    col_valid = col_ids < n_samples

    # ---- translation: running per-lane sum of squared errors --------------
    d = jnp.where(jnp.logical_and(is_trans, col_valid), p - t, 0.0)
    acc_sq_ref[...] += jnp.sum(d * d, axis=0, keepdims=True)        # (1, tile_cols)

    # ---- rotation: |<normalize(qp + 1e-8), normalize(qt + 1e-8)>| ---------
    qsel = jnp.logical_and(is_quat, col_valid)
    qp = jnp.where(qsel, p + 1e-8, 0.0)
    qt = jnp.where(qsel, t + 1e-8, 0.0)
    ssp = jnp.sum(qp * qp, axis=0, keepdims=True)                    # (1, tile_cols)
    sst = jnp.sum(qt * qt, axis=0, keepdims=True)
    dot_raw = jnp.sum(qp * qt, axis=0, keepdims=True)
    # F.normalize clamp: x / max(||x||, 1e-12)  <=>  x * rsqrt(max(||x||^2, 1e-24)).
    inv_p = _refined_rsqrt(jnp.maximum(ssp, 1e-24))
    inv_t = _refined_rsqrt(jnp.maximum(sst, 1e-24))
    # Masked-out lanes have dot_raw == 0 and contribute nothing.
    acc_dot_ref[...] += jnp.abs(dot_raw * inv_p * inv_t)

    @pl.when(i == pl.num_programs(0) - 1)
    def _():
        sum_sq = jnp.sum(acc_sq_ref[...], axis=1, keepdims=True)     # (1, 1)
        sum_dot = jnp.sum(acc_dot_ref[...], axis=1, keepdims=True)   # (1, 1)
        l_t = sum_sq * (1.0 / (3.0 * n_samples))    # mse_loss mean over N*3
        l_r = 1.0 - sum_dot * (1.0 / n_samples)     # 1 - mean(|dot|)
        loss_ref[...] = l_t + w_rot * l_r


def _rmse_kernel(pred_ref, label_ref, out_ref, acc_ref,
                 *, n_samples, n_chan, tile_cols):
    i = pl.program_id(0)

    @pl.when(i == 0)
    def _():
        acc_ref[...] = jnp.zeros_like(acc_ref)

    p = pred_ref[...].astype(jnp.float32)
    l = label_ref[...].astype(jnp.float32)
    col_ids = jax.lax.broadcasted_iota(jnp.int32, (1, tile_cols), 1) + i * tile_cols
    col_valid = col_ids < n_samples
    d = jnp.where(col_valid, p - l, 0.0)
    acc_ref[...] += jnp.sum(d * d, axis=0, keepdims=True)

    @pl.when(i == pl.num_programs(0) - 1)
    def _():
        s = jnp.sum(acc_ref[...], axis=1, keepdims=True)
        out_ref[...] = jnp.sqrt(s * (1.0 / (n_samples * n_chan)))


# ------------------------------ wrappers ------------------------------

def _channel_major(x):
    """(..., C) -> (C, N): one XLA transpose pass that buys full lane density."""
    c = x.shape[-1]
    n = 1
    for s in x.shape[:-1]:
        n *= s
    return jnp.transpose(x.reshape(n, c)), n, c


def _col_tiling(n):
    if n <= _TILE_COLS:
        return n, 1                        # single full-extent block
    return _TILE_COLS, pl.cdiv(n, _TILE_COLS)


_COMPILER_PARAMS = pltpu.CompilerParams(
    dimension_semantics=("arbitrary",),        # scratch accumulators are carried
    vmem_limit_bytes=32 * 1024 * 1024,         # explicit budget; fits v5e/v6e/v7x
)


def weighted_loss(pred, target, w_rot=1.0):
    """loss = mse(pred[...,:3], target[...,:3])
            + w_rot * (1 - mean|<normalize(pred[...,3:]+1e-8), normalize(target[...,3:]+1e-8)>|)
    pred/target: (B, T, C) with C = 3 translation + quaternion dims."""
    assert pred.shape == target.shape and pred.shape[-1] > 3
    p2, n, c = _channel_major(pred)
    t2, _, _ = _channel_major(target)

    tile_cols, num_tiles = _col_tiling(n)
    kernel = functools.partial(_weighted_loss_kernel, n_samples=n, n_chan=c,
                               tile_cols=tile_cols, w_rot=float(w_rot))
    loss = pl.pallas_call(
        kernel,
        out_shape=jax.ShapeDtypeStruct((1, 1), jnp.float32),
        grid=(num_tiles,),
        in_specs=[
            pl.BlockSpec((c, tile_cols), lambda i: (0, i)),
            pl.BlockSpec((c, tile_cols), lambda i: (0, i)),
        ],
        out_specs=pl.BlockSpec((1, 1), lambda i: (0, 0)),
        scratch_shapes=[pltpu.VMEM((1, tile_cols), jnp.float32),
                        pltpu.VMEM((1, tile_cols), jnp.float32)],
        compiler_params=_COMPILER_PARAMS,
    )(p2, t2)
    return loss[0, 0]


def rmse_error(pred, label):
    """WeightedLoss.RMSEError: sqrt(mean((pred - label)^2))."""
    assert pred.shape == label.shape
    p2, n, c = _channel_major(pred)
    l2, _, _ = _channel_major(label)

    tile_cols, num_tiles = _col_tiling(n)
    kernel = functools.partial(_rmse_kernel, n_samples=n, n_chan=c,
                               tile_cols=tile_cols)
    out = pl.pallas_call(
        kernel,
        out_shape=jax.ShapeDtypeStruct((1, 1), jnp.float32),
        grid=(num_tiles,),
        in_specs=[
            pl.BlockSpec((c, tile_cols), lambda i: (0, i)),
            pl.BlockSpec((c, tile_cols), lambda i: (0, i)),
        ],
        out_specs=pl.BlockSpec((1, 1), lambda i: (0, 0)),
        scratch_shapes=[pltpu.VMEM((1, tile_cols), jnp.float32)],
        compiler_params=_COMPILER_PARAMS,
    )(p2, l2)
    return out[0, 0]


# --------------------------------- main ---------------------------------

if __name__ == "__main__":
    key = jax.random.PRNGKey(0)
    k1, k2 = jax.random.split(key)

    # Small shapes consistent with the module: (batch=2, seq=8, 3 translation
    # + 4 quaternion channels).
    B, T, C = 2, 8, 7
    pred = jax.random.normal(k1, (B, T, C), jnp.float32)
    target = jax.random.normal(k2, (B, T, C), jnp.float32)

    loss_fn = jax.jit(weighted_loss)
    loss = jax.block_until_ready(loss_fn(pred, target))

    # pure-JAX reference for correctness (mirrors the PyTorch module).
    def ref_loss(pred, target, w_rot=1.0):
        l_t = jnp.mean((pred[:, :, :3] - target[:, :, :3]) ** 2)
        qp = pred[:, :, 3:] + 1e-8
        qt = target[:, :, 3:] + 1e-8
        qp = qp / jnp.maximum(jnp.linalg.norm(qp, axis=-1, keepdims=True), 1e-12)
        qt = qt / jnp.maximum(jnp.linalg.norm(qt, axis=-1, keepdims=True), 1e-12)
        l_r = 1.0 - jnp.mean(jnp.abs(jnp.sum(qp * qt, axis=-1)))
        return l_t + w_rot * l_r

    ref = ref_loss(pred, target)
    assert loss.shape == (), loss.shape
    assert bool(jnp.isfinite(loss)), loss
    assert abs(float(loss) - float(ref)) <= 1e-5 * max(1.0, abs(float(ref))), \
        (float(loss), float(ref))

    rmse = jax.block_until_ready(jax.jit(rmse_error)(pred, target))
    rmse_ref = jnp.sqrt(jnp.mean((pred - target) ** 2))
    assert bool(jnp.isfinite(rmse)), rmse
    assert abs(float(rmse) - float(rmse_ref)) <= 1e-5, (float(rmse), float(rmse_ref))

    print("KERNEL_OK")
</pallas_src>

<mosaic_0001>
module attributes {stable_mosaic.version = 11 : i64} {
  func.func @_weighted_loss_kernel(%arg0: i32, %arg1: memref<7x16xf32, #tpu.memory_space<vmem>>, %arg2: memref<7x16xf32, #tpu.memory_space<vmem>>, %arg3: memref<1x1xf32, #tpu.memory_space<vmem>>, %arg4: memref<1x16xf32, #tpu.memory_space<vmem>>, %arg5: memref<1x16xf32, #tpu.memory_space<vmem>>) attributes {dimension_semantics = [#tpu.dimension_semantics<arbitrary>], iteration_bounds = array<i64: 1>, scalar_prefetch = 0 : i64, scratch_operands = 2 : i64, tpu.core_type = #tpu.core_type<tc>, window_params = [{transform_indices = @transform_0, window_bounds = array<i64: 7, 16>}, {transform_indices = @transform_1, window_bounds = array<i64: 7, 16>}, {pipeline_mode = #tpu.pipeline_mode<synchronous>, transform_indices = @transform_2, window_bounds = array<i64: 1, 1>}]} {
    %c0_i32 = arith.constant 0 : i32
    %0 = arith.cmpi eq, %arg0, %c0_i32 : i32
    %1 = arith.extui %0 : i1 to i32
    %c0_i32_0 = arith.constant 0 : i32
    %2 = arith.cmpi ne, %1, %c0_i32_0 : i32
    scf.if %2 {
      %cst_30 = arith.constant 0.000000e+00 : f32
      %76 = vector.broadcast %cst_30 : f32 to vector<1x16xf32>
      %c0_31 = arith.constant 0 : index
      %c0_32 = arith.constant 0 : index
      %77 = vector.load %arg4[%c0_31, %c0_32] : memref<1x16xf32, #tpu.memory_space<vmem>>, vector<1x16xf32>
      tpu.vector_store %arg4[%c0_31, %c0_32], %76 {strides = array<i32>} : memref<1x16xf32, #tpu.memory_space<vmem>>, vector<1x16xf32>,
      %cst_33 = arith.constant 0.000000e+00 : f32
      %78 = vector.broadcast %cst_33 : f32 to vector<1x16xf32>
      %c0_34 = arith.constant 0 : index
      %c0_35 = arith.constant 0 : index
      %79 = vector.load %arg5[%c0_34, %c0_35] : memref<1x16xf32, #tpu.memory_space<vmem>>, vector<1x16xf32>
      tpu.vector_store %arg5[%c0_34, %c0_35], %78 {strides = array<i32>} : memref<1x16xf32, #tpu.memory_space<vmem>>, vector<1x16xf32>,
    } else {
    }
    %c0 = arith.constant 0 : index
    %c0_1 = arith.constant 0 : index
    %3 = vector.load %arg1[%c0, %c0_1] : memref<7x16xf32, #tpu.memory_space<vmem>>, vector<7x16xf32>
    %c0_2 = arith.constant 0 : index
    %c0_3 = arith.constant 0 : index
    %4 = vector.load %arg2[%c0_2, %c0_3] : memref<7x16xf32, #tpu.memory_space<vmem>>, vector<7x16xf32>
    %5 = tpu.iota {dimensions = array<i32: 0>} : vector<7x1xi32>
    %c3_i32 = arith.constant 3 : i32
    %6 = vector.broadcast %c3_i32 : i32 to vector<7x1xi32>
    %7 = arith.cmpi slt, %5, %6 : vector<7x1xi32>
    %cst = arith.constant dense<true> : vector<7x1xi1>
    %8 = arith.xori %7, %cst : vector<7x1xi1>
    %9 = tpu.iota {dimensions = array<i32: 1>} : vector<1x16xi32>
    %c16_i32 = arith.constant 16 : i32
    %10 = arith.muli %arg0, %c16_i32 : i32
    %11 = vector.broadcast %10 : i32 to vector<1x16xi32>
    %12 = arith.addi %9, %11 : vector<1x16xi32>
    %c16_i32_4 = arith.constant 16 : i32
    %13 = vector.broadcast %c16_i32_4 : i32 to vector<1x16xi32>
    %14 = arith.cmpi slt, %12, %13 : vector<1x16xi32>
    %15 = vector.broadcast %7 : vector<7x1xi1> to vector<7x16xi1>
    %16 = vector.broadcast %14 : vector<1x16xi1> to vector<7x16xi1>
    %17 = arith.andi %15, %16 : vector<7x16xi1>
    %18 = arith.subf %3, %4 : vector<7x16xf32>
    %cst_5 = arith.constant 0.000000e+00 : f32
    %19 = vector.broadcast %cst_5 : f32 to vector<7x16xf32>
    %20 = arith.select %17, %18, %19 : vector<7x16xi1>, vector<7x16xf32>
    %c0_6 = arith.constant 0 : index
    %c0_7 = arith.constant 0 : index
    %21 = vector.load %arg4[%c0_6, %c0_7] : memref<1x16xf32, #tpu.memory_space<vmem>>, vector<1x16xf32>
    %22 = arith.mulf %20, %20 : vector<7x16xf32>
    %cst_8 = arith.constant dense<0.000000e+00> : vector<16xf32>
    %23 = vector.multi_reduction <add>, %22, %cst_8 [0] : vector<7x16xf32> to vector<16xf32>
    %24 = vector.shape_cast %23 : vector<16xf32> to vector<1x16xf32>
    %25 = arith.addf %21, %24 : vector<1x16xf32>
    %c0_9 = arith.constant 0 : index
    %c0_10 = arith.constant 0 : index
    %26 = vector.load %arg4[%c0_9, %c0_10] : memref<1x16xf32, #tpu.memory_space<vmem>>, vector<1x16xf32>
    tpu.vector_store %arg4[%c0_9, %c0_10], %25 {strides = array<i32>} : memref<1x16xf32, #tpu.memory_space<vmem>>, vector<1x16xf32>,
    %27 = vector.broadcast %8 : vector<7x1xi1> to vector<7x16xi1>
    %28 = vector.broadcast %14 : vector<1x16xi1> to vector<7x16xi1>
    %29 = arith.andi %27, %28 : vector<7x16xi1>
    %cst_11 = arith.constant 9.99999993E-9 : f32
    %30 = vector.broadcast %cst_11 : f32 to vector<7x16xf32>
    %31 = arith.addf %3, %30 : vector<7x16xf32>
    %cst_12 = arith.constant 0.000000e+00 : f32
    %32 = vector.broadcast %cst_12 : f32 to vector<7x16xf32>
    %33 = arith.select %29, %31, %32 : vector<7x16xi1>, vector<7x16xf32>
    %cst_13 = arith.constant 9.99999993E-9 : f32
    %34 = vector.broadcast %cst_13 : f32 to vector<7x16xf32>
    %35 = arith.addf %4, %34 : vector<7x16xf32>
    %cst_14 = arith.constant 0.000000e+00 : f32
    %36 = vector.broadcast %cst_14 : f32 to vector<7x16xf32>
    %37 = arith.select %29, %35, %36 : vector<7x16xi1>, vector<7x16xf32>
    %38 = arith.mulf %33, %33 : vector<7x16xf32>
    %cst_15 = arith.constant dense<0.000000e+00> : vector<16xf32>
    %39 = vector.multi_reduction <add>, %38, %cst_15 [0] : vector<7x16xf32> to vector<16xf32>
    %40 = vector.shape_cast %39 : vector<16xf32> to vector<1x16xf32>
    %41 = arith.mulf %37, %37 : vector<7x16xf32>
    %cst_16 = arith.constant dense<0.000000e+00> : vector<16xf32>
    %42 = vector.multi_reduction <add>, %41, %cst_16 [0] : vector<7x16xf32> to vector<16xf32>
    %43 = vector.shape_cast %42 : vector<16xf32> to vector<1x16xf32>
    %44 = arith.mulf %33, %37 : vector<7x16xf32>
    %cst_17 = arith.constant dense<0.000000e+00> : vector<16xf32>
    %45 = vector.multi_reduction <add>, %44, %cst_17 [0] : vector<7x16xf32> to vector<16xf32>
    %46 = vector.shape_cast %45 : vector<16xf32> to vector<1x16xf32>
    %cst_18 = arith.constant 1.000000e-24 : f32
    %47 = vector.broadcast %cst_18 : f32 to vector<1x16xf32>
    %48 = arith.maximumf %40, %47 : vector<1x16xf32>
    %49 = math.rsqrt %48 : vector<1x16xf32>
    %cst_19 = arith.constant 5.000000e-01 : f32
    %50 = vector.broadcast %cst_19 : f32 to vector<1x16xf32>
    %51 = arith.mulf %50, %48 : vector<1x16xf32>
    %52 = arith.mulf %51, %49 : vector<1x16xf32>
    %53 = arith.mulf %52, %49 : vector<1x16xf32>
    %cst_20 = arith.constant 1.500000e+00 : f32
    %54 = vector.broadcast %cst_20 : f32 to vector<1x16xf32>
    %55 = arith.subf %54, %53 : vector<1x16xf32>
    %56 = arith.mulf %49, %55 : vector<1x16xf32>
    %cst_21 = arith.constant 1.000000e-24 : f32
    %57 = vector.broadcast %cst_21 : f32 to vector<1x16xf32>
    %58 = arith.maximumf %43, %57 : vector<1x16xf32>
    %59 = math.rsqrt %58 : vector<1x16xf32>
    %cst_22 = arith.constant 5.000000e-01 : f32
    %60 = vector.broadcast %cst_22 : f32 to vector<1x16xf32>
    %61 = arith.mulf %60, %58 : vector<1x16xf32>
    %62 = arith.mulf %61, %59 : vector<1x16xf32>
    %63 = arith.mulf %62, %59 : vector<1x16xf32>
    %cst_23 = arith.constant 1.500000e+00 : f32
    %64 = vector.broadcast %cst_23 : f32 to vector<1x16xf32>
    %65 = arith.subf %64, %63 : vector<1x16xf32>
    %66 = arith.mulf %59, %65 : vector<1x16xf32>
    %c0_24 = arith.constant 0 : index
    %c0_25 = arith.constant 0 : index
    %67 = vector.load %arg5[%c0_24, %c0_25] : memref<1x16xf32, #tpu.memory_space<vmem>>, vector<1x16xf32>
    %68 = arith.mulf %46, %56 : vector<1x16xf32>
    %69 = arith.mulf %68, %66 : vector<1x16xf32>
    %70 = math.absf %69 : vector<1x16xf32>
    %71 = arith.addf %67, %70 : vector<1x16xf32>
    %c0_26 = arith.constant 0 : index
    %c0_27 = arith.constant 0 : index
    %72 = vector.load %arg5[%c0_26, %c0_27] : memref<1x16xf32, #tpu.memory_space<vmem>>, vector<1x16xf32>
    tpu.vector_store %arg5[%c0_26, %c0_27], %71 {strides = array<i32>} : memref<1x16xf32, #tpu.memory_space<vmem>>, vector<1x16xf32>,
    %c0_i32_28 = arith.constant 0 : i32
    %73 = arith.cmpi eq, %arg0, %c0_i32_28 : i32
    %74 = arith.extui %73 : i1 to i32
    %c0_i32_29 = arith.constant 0 : i32
    %75 = arith.cmpi ne, %74, %c0_i32_29 : i32
    scf.if %75 {
      %c0_30 = arith.constant 0 : index
      %c0_31 = arith.constant 0 : index
      %76 = vector.load %arg4[%c0_30, %c0_31] : memref<1x16xf32, #tpu.memory_space<vmem>>, vector<1x16xf32>
      %cst_32 = arith.constant dense<0.000000e+00> : vector<1xf32>
      %77 = vector.multi_reduction <add>, %76, %cst_32 [1] : vector<1x16xf32> to vector<1xf32>
      %78 = vector.shape_cast %77 : vector<1xf32> to vector<1x1xf32>
      %c0_33 = arith.constant 0 : index
      %c0_34 = arith.constant 0 : index
      %79 = vector.load %arg5[%c0_33, %c0_34] : memref<1x16xf32, #tpu.memory_space<vmem>>, vector<1x16xf32>
      %cst_35 = arith.constant dense<0.000000e+00> : vector<1xf32>
      %80 = vector.multi_reduction <add>, %79, %cst_35 [1] : vector<1x16xf32> to vector<1xf32>
      %81 = vector.shape_cast %80 : vector<1xf32> to vector<1x1xf32>
      %cst_36 = arith.constant 0.020833334 : f32
      %82 = vector.broadcast %cst_36 : f32 to vector<1x1xf32>
      %83 = arith.mulf %78, %82 : vector<1x1xf32>
      %cst_37 = arith.constant 6.250000e-02 : f32
      %84 = vector.broadcast %cst_37 : f32 to vector<1x1xf32>
      %85 = arith.mulf %81, %84 : vector<1x1xf32>
      %cst_38 = arith.constant 1.000000e+00 : f32
      %86 = vector.broadcast %cst_38 : f32 to vector<1x1xf32>
      %87 = arith.subf %86, %85 : vector<1x1xf32>
      %cst_39 = arith.constant 1.000000e+00 : f32
      %88 = vector.broadcast %cst_39 : f32 to vector<1x1xf32>
      %89 = arith.mulf %88, %87 : vector<1x1xf32>
      %90 = arith.addf %83, %89 : vector<1x1xf32>
      %c0_40 = arith.constant 0 : index
      %c0_41 = arith.constant 0 : index
      %91 = vector.load %arg3[%c0_40, %c0_41] : memref<1x1xf32, #tpu.memory_space<vmem>>, vector<1x1xf32>
      tpu.vector_store %arg3[%c0_40, %c0_41], %90 {strides = array<i32>} : memref<1x1xf32, #tpu.memory_space<vmem>>, vector<1x1xf32>,
    } else {
    }
    return
  }
  func.func @transform_0(%arg0: i32) -> (i32, i32) {
    %c0_i32 = arith.constant 0 : i32
    %c0_i32_0 = arith.constant 0 : i32
    return %c0_i32, %arg0 : i32, i32
  }
  func.func @transform_1(%arg0: i32) -> (i32, i32) {
    %c0_i32 = arith.constant 0 : i32
    %c0_i32_0 = arith.constant 0 : i32
    return %c0_i32, %arg0 : i32, i32
  }
  func.func @transform_2(%arg0: i32) -> (i32, i32) {
    %c0_i32 = arith.constant 0 : i32
    %c0_i32_0 = arith.constant 0 : i32
    %c0_i32_1 = arith.constant 0 : i32
    return %c0_i32, %c0_i32_0 : i32, i32
  }
}

</mosaic_0001>

<llo_original>
// kernel: weighted_loss.1
$region0: #{weighted_loss.1}
  #allocation0 [shape = 'u32[]', space=smem, size = 0x4, offset = 0x4, fixed_abs, tag = 'smem constant byte address 0x4 - core index']
  #allocation1 [shape = 'u32[144,128]{1,0:T(1,128)}', space=vmem, size = 0x12000, scoped, tag = 'internal scratch']
  #allocation2 [shape = 'f32[1,16]{1,0:T(1,128)}', space=vmem, size = 0x200, scoped, tag = 'scratch operand']
  #allocation3 [shape = 'f32[1,16]{1,0:T(1,128)}', space=vmem, size = 0x200, scoped, tag = 'scratch operand']
  %s0 = inlined_call_operand.vmem [shape: f32[7,16], index: 0, kind: input, shape index: {}]
  %s1 = inlined_call_operand.vmem [shape: f32[7,16], index: 1, kind: input, shape index: {}]
  %s2 = inlined_call_operand.hbm [shape: f32[1,1], index: 2, kind: output, shape index: {}]
  %s3 = sld [smem:[#allocation0]]
  $region26: #{weighted_loss.1} parent=0
    _
  %s5 = ssub.s32 1, %s3
  %s6 = scalar_select 0, %s5, %s3
  $region1: #{weighted_loss.1} parent=0
    #allocation4 [shape = 'u8[512]{0}', space=vmem, size = 0x400, scoped, tag = 'output window, operand 0, single buffered']
    #allocation5 [shape = 's32[1]{0}', space=sflag, size = 0x4, scoped, tag = 'scoped memory for weighted_loss.1']
    %7 = vsyncpa [#allocation5], 0
    // Predicated region
    $region2: #{weighted_loss.1} parent=1 // pred_check
      _
    $region3: #{weighted_loss.1} parent=1 // pred_check_branch
      %9 = sbr.rel (0) target = $region5
    $region4: #{weighted_loss.1} parent=1 // pred_region
      _
    $region5: #{weighted_loss.1} parent=1 // pred_fallthru
      _
    // Predicated region
    $region6: #{weighted_loss.1} parent=1 // pred_check
      _
    $region7: #{weighted_loss.1} parent=1 // pred_check_branch
      %11 = sbr.rel (0) target = $region9
    $region8: #{weighted_loss.1} parent=1 // pred_region
      _
    $region9: #{weighted_loss.1} parent=1 // pred_fallthru
      _
    %p12 = scmp.eq.s32.totalorder 0, 0
    // Predicated region
    $region10: #{weighted_loss.1} parent=1 // pred_check
      %p13 = pneg %p12
    $region11: #{weighted_loss.1} parent=1 // pred_check_branch
      %15 = sbr.rel (%p13) target = $region13
    $region12: #{weighted_loss.1} parent=1 // pred_region
      %vm16 = vcmask 122880
      %17 = vst.msk [vmem:[#allocation2] sm:$0x1] %vm16, 0.0
      %18 = vst.msk [vmem:[#allocation3] sm:$0x1] %vm16, 0.0
    $region13: #{weighted_loss.1} parent=1 // pred_fallthru
      _
    %v19 = vld [vmem:[%s0] sm:$0x7f]
    %v20 = vld [vmem:[%s1] sm:$0x7f]
    %v21 = vlaneseq
    %v22 = vshrl.u32 %v21, 7
    %vm23 = vcmp.lt.s32.totalorder %v22, 3
    %vm24 = vmxor %vm23, 1
    %v25 = vlaneseq
    %v26 = vand.u32 %v25, 127
    %s27 = smul.u32 0, 16
    %v28 = vstv %s27
    %v29 = vadd.s32 %v26, %v28
    %vm30 = vcmp.lt.s32.totalorder %v29, 16
    %v31 = vsel %vm23, 1, 0
    %vm32 = vcmp.eq.s32.totalorder %v31, 1
    %v33 = vsel %vm30, 1, 0
    %vm34 = vcmp.eq.s32.totalorder %v33, 1
    %vm35 = vmand %vm32, %vm34
    %v36 = vsub.f32 %v19, %v20
    %v37 = vsel %vm35, %v36, 0.0
    %v38 = vld [vmem:[#allocation2] sm:$0x1]
    %v39 = vmul.f32 %v37, %v37
    %vm40 = vcmask 129024
    %v41 = vsel %vm40, %v39, 0.0
    %v42 = vrot.slane %v41, 4
    %v43 = vadd.f32 %v41, %v42
    %v44 = vrot.slane %v43, 2
    %v45 = vadd.f32 %v43, %v44
    %v46 = vrot.slane %v45, 1
    %v47 = vadd.f32 %v45, %v46
    %v48 = vadd.f32 %v38, %v47
    %vm49 = vcmask 122880
    %50 = vst.msk [vmem:[#allocation2] sm:$0x1] %vm49, %v48
    %v51 = vsel %vm24, 1, 0
    %vm52 = vcmp.eq.s32.totalorder %v51, 1
    %vm53 = vmand %vm52, %vm34
    %v54 = vadd.f32 %v19, 1e-08
    %v55 = vsel %vm53, %v54, 0.0
    %v56 = vadd.f32 %v20, 1e-08
    %v57 = vsel %vm53, %v56, 0.0
    %v58 = vmul.f32 %v55, %v55
    %v59 = vsel %vm40, %v58, 0.0
    %v60 = vrot.slane %v59, 4
    %v61 = vadd.f32 %v59, %v60
    %v62 = vrot.slane %v61, 2
    %v63 = vadd.f32 %v61, %v62
    %v64 = vrot.slane %v63, 1
    %v65 = vadd.f32 %v63, %v64
    %v66 = vmul.f32 %v57, %v57
    %v67 = vsel %vm40, %v66, 0.0
    %v68 = vrot.slane %v67, 4
    %v69 = vadd.f32 %v67, %v68
    %v70 = vrot.slane %v69, 2
    %v71 = vadd.f32 %v69, %v70
    %v72 = vrot.slane %v71, 1
    %v73 = vadd.f32 %v71, %v72
    %v74 = vmul.f32 %v55, %v57
    %v75 = vsel %vm40, %v74, 0.0
    %v76 = vrot.slane %v75, 4
    %v77 = vadd.f32 %v75, %v76
    %v78 = vrot.slane %v77, 2
    %v79 = vadd.f32 %v77, %v78
    %v80 = vrot.slane %v79, 1
    %v81 = vadd.f32 %v79, %v80
    %v82 = vmax.f32 %v65, 1e-24
    %v83 = vrsqrt.pop %v82
    %v84 = vmul.f32 %v82, 0.5
    %v85 = vmul.f32 %v84, %v83
    %v86 = vmul.f32 %v85, %v83
    %v87 = vsub.f32 1.5, %v86
    %v88 = vmul.f32 %v83, %v87
    %v89 = vmax.f32 %v73, 1e-24
    %v90 = vrsqrt.pop %v89
    %v91 = vmul.f32 %v89, 0.5
    %v92 = vmul.f32 %v91, %v90
    %v93 = vmul.f32 %v92, %v90
    %v94 = vsub.f32 1.5, %v93
    %v95 = vmul.f32 %v90, %v94
    %v96 = vld [vmem:[#allocation3] sm:$0x1]
    %v97 = vmul.f32 %v81, %v88
    %v98 = vmul.f32 %v97, %v95
    %v99 = vand.u32 2147483647, %v98
    %v100 = vadd.f32 %v96, %v99
    %101 = vst.msk [vmem:[#allocation3] sm:$0x1] %vm49, %v100
    // Predicated region
    $region14: #{weighted_loss.1} parent=1 // pred_check
      %p102 = pneg %p12
    $region15: #{weighted_loss.1} parent=1 // pred_check_branch
      %104 = sbr.rel (%p102) target = $region17
    $region16: #{weighted_loss.1} parent=1 // pred_region
      %v105 = vld [vmem:[#allocation2] sm:$0x1]
      %v106 = vsel %vm49, %v105, 0.0
      %107 = vadd.xlane.f32.xlu0 %v106
      %v108 = vpop.xlane.xlu0 %107
      %v109 = vld [vmem:[#allocation3] sm:$0x1]
      %v110 = vsel %vm49, %v109, 0.0
      %111 = vadd.xlane.f32.xlu0 %v110
      %v112 = vpop.xlane.xlu0 %111
      %v113 = vmul.f32 %v108, 0.020833334
      %v114 = vmul.f32 %v112, 0.0625
      %v115 = vsub.f32 1.0, %v114
      %v116 = vadd.f32 %v113, %v115
      %vm117 = vcmask 0
      %118 = vst.msk [vmem:[#allocation4] sm:$0x1] %vm117, %v116
    $region17: #{weighted_loss.1} parent=1 // pred_fallthru
      _
    // Predicated region
    $region18: #{weighted_loss.1} parent=1 // pred_check
      _
    $region19: #{weighted_loss.1} parent=1 // pred_check_branch
      %120 = sbr.rel (0) target = $region21
    $region20: #{weighted_loss.1} parent=1 // pred_region
      %s122 = ssub.s32 16, 16
      %123 = vsyncadd [#allocation5], %s122
      %s125 = sshll.u32 [#allocation4], 4
      %s126 = int_to_ptr.vmem [resolvable:$true] %s125
      %128 = dma.vmem_to_hbm [thread:$0]  %s126, 16, %s2, [#allocation5]
    $region21: #{weighted_loss.1} parent=1 // pred_fallthru
      _
    // Predicated region
    $region22: #{weighted_loss.1} parent=1 // pred_check
      _
    $region23: #{weighted_loss.1} parent=1 // pred_check_branch
      %130 = sbr.rel (0) target = $region25
    $region24: #{weighted_loss.1} parent=1 // pred_region
      %131 = dma.done [#allocation5], 16
    $region25: #{weighted_loss.1} parent=1 // pred_fallthru
      _
    %132 = vsyncpa [#allocation5], 1

</llo_original>
